<compile_context>
chip_gen: v6e
topology: v6e:2x2x1
jax: 0.10.0
libtpu: 0.0.40
codegen_flags: <defaults>
</compile_context>

<pallas_src>
import functools
import math

import jax
import jax.numpy as jnp
from jax import lax
from jax.experimental import pallas as pl
from jax.experimental.pallas import tpu as pltpu


def _round_up(x, m):
    return (x + m - 1) // m * m


def _subpixel_conv_kernel(x_ref, w_ref, b_ref, o_ref, *, wp, cols, k):
    """One batch element of the sub-pixel 3x3 conv.

    x_ref: (Cin_p, Lpad)      row-flattened, zero-padded original image
    w_ref: (Csub, k*k*Cin_p)  collapsed sub-pixel weights (Csub = scale^2 * Cout)
    b_ref: (Csub, 1)          f32 bias, repeated per sub-pixel position
    o_ref: (Csub, cols)       cols = Hin * wp (lane-dense; junk cols >= Win are
                              discarded by the wrapper)
    """
    # im2col: tap (oh, ow) of the padded image is the contiguous lane window starting
    # at oh*wp + ow.  Rows per tap are sublane-tile aligned (Cin_p padded), so the
    # concat is pure tile copies; then a single MXU matmul with f32 accumulation.
    taps = []
    for oh in range(k):
        for ow in range(k):
            delta = oh * wp + ow
            taps.append(x_ref[:, delta:delta + cols])
    im2col = jnp.concatenate(taps, axis=0)                     # (k*k*Cin_p, cols)
    acc = jnp.dot(w_ref[...], im2col,
                  preferred_element_type=jnp.float32)          # (Csub, cols) f32
    o_ref[...] = (acc + b_ref[...]).astype(o_ref.dtype)        # bias added once


def resize_conv2d(x_nchw, w_oihw, bias, *, scale_factor=2,
                  compute_dtype=jnp.bfloat16):
    """Forward of ResizeConv2d: nearest-upsample(scale) -> Conv2d(3x3, stride=1, pad=1).

    x_nchw: (N, Cin, Hin, Win) f32; w_oihw: (Cout, Cin, 3, 3); bias: (Cout,).
    Returns (N, Cout, Hin*scale, Win*scale) f32 (NCHW, PyTorch convention).
    """
    N, Cin, Hin, Win = x_nchw.shape
    Cout, _, K, _ = w_oihw.shape
    s = int(scale_factor)
    assert K == 3, "module uses kernel_size=3 with padding=1"
    Csub = Cout * s * s

    # ---- fold the nearest upsample into the conv weights (sub-pixel conv) -------------
    # out[n,co,s*hi+dh,s*wi+dw] = b[co] + sum_{ci,oh,ow} Wsub[co,dh,dw,oh,ow,ci]
    #                                       * xpad[n,ci,hi+oh,wi+ow]
    # where offset(d, k) = (d + k - 1)//s + 1 and Wsub sums the W taps mapping there.
    d = jnp.arange(s)[:, None, None]
    o = jnp.arange(K)[None, :, None]
    kk = jnp.arange(K)[None, None, :]
    R = ((d + kk - 1) // s + 1 == o).astype(jnp.float32)        # (s, offset, tap)
    wsub = jnp.einsum('hak,wbl,oikl->ohwabi', R, R,
                      w_oihw.astype(jnp.float32))               # (Cout, s, s, 3, 3, Cin)

    # Pad Cin to the sublane packing of the MXU dtype so the in-kernel concat is aligned.
    cin_tile = 16 if compute_dtype == jnp.bfloat16 else 8
    Cin_p = _round_up(Cin, cin_tile)
    wsub = jnp.pad(wsub, ((0, 0),) * 5 + ((0, Cin_p - Cin),))
    wmat = wsub.reshape(Csub, K * K * Cin_p).astype(compute_dtype)
    bsub = jnp.repeat(bias.astype(jnp.float32), s * s).reshape(Csub, 1)

    # ---- flatten + zero-pad the ORIGINAL image (no upsampled intermediate in HBM) -----
    # Padded row width Wp chosen so Hin*Wp is a multiple of 128 (lane-dense output).
    r = 128 // math.gcd(Hin, 128)
    Wp = _round_up(Win + 2, r)
    cols = Hin * Wp
    Lpad = _round_up((Hin + 2) * Wp + (K - 1), 128)

    xp = jnp.pad(x_nchw.astype(jnp.float32),
                 ((0, 0), (0, Cin_p - Cin), (1, 1), (1, Wp - Win - 1)))
    xff = xp.reshape(N, Cin_p, (Hin + 2) * Wp)
    xff = jnp.pad(xff, ((0, 0), (0, 0), (0, Lpad - (Hin + 2) * Wp)))
    xff = xff.astype(compute_dtype)

    kernel = functools.partial(_subpixel_conv_kernel, wp=Wp, cols=cols, k=K)

    out_wide = pl.pallas_call(
        kernel,
        out_shape=jax.ShapeDtypeStruct((N, Csub, cols), jnp.float32),
        grid_spec=pltpu.PrefetchScalarGridSpec(
            num_scalar_prefetch=0,
            grid=(N,),                                          # one batch element / step
            in_specs=[
                pl.BlockSpec((None, Cin_p, Lpad), lambda n: (n, 0, 0)),
                pl.BlockSpec((Csub, K * K * Cin_p), lambda n: (0, 0)),
                pl.BlockSpec((Csub, 1), lambda n: (0, 0)),
            ],
            out_specs=pl.BlockSpec((None, Csub, cols), lambda n: (n, 0, 0)),
        ),
        compiler_params=pltpu.CompilerParams(
            dimension_semantics=("parallel",),                  # v7x: use both TCs
            vmem_limit_bytes=32 * 1024 * 1024,
        ),
    )(xff, wmat, bsub)

    # ---- depth_to_space: (N, Cout*s*s, Hin*Wp) -> (N, Cout, Hin*s, Win*s) --------------
    out = out_wide.reshape(N, Cout, s, s, Hin, Wp)[..., :Win]   # drop junk columns
    out = out.transpose(0, 1, 4, 2, 5, 3).reshape(N, Cout, Hin * s, Win * s)
    return out.astype(x_nchw.dtype)


def _reference(x_nchw, w_oihw, bias, *, scale_factor=2, padding=1):
    x_up = jnp.repeat(jnp.repeat(x_nchw, scale_factor, axis=2), scale_factor, axis=3)
    out = lax.conv_general_dilated(
        x_up, w_oihw, window_strides=(1, 1),
        padding=((padding, padding), (padding, padding)),
        dimension_numbers=("NCHW", "OIHW", "NCHW"))
    return out + bias.reshape(1, -1, 1, 1)


if __name__ == "__main__":
    # ResizeConv2d(in_channels=4, out_channels=8, kernel_size=3, scale_factor=2)
    N, Cin, Hin, Win = 2, 4, 16, 16
    Cout, K, scale = 8, 3, 2

    key = jax.random.PRNGKey(0)
    kx, kw, kb = jax.random.split(key, 3)

    x = jax.random.normal(kx, (N, Cin, Hin, Win), dtype=jnp.float32)

    # PyTorch Conv2d default init: U(-1/sqrt(fan_in), +1/sqrt(fan_in))
    fan_in = Cin * K * K
    bound = 1.0 / float(jnp.sqrt(jnp.float32(fan_in)))
    w_oihw = jax.random.uniform(kw, (Cout, Cin, K, K), jnp.float32, -bound, bound)
    bias = jax.random.uniform(kb, (Cout,), jnp.float32, -bound, bound)

    ref = _reference(x, w_oihw, bias, scale_factor=scale, padding=1)

    # 1) exactness check: f32 MXU operands
    fwd_f32 = jax.jit(functools.partial(resize_conv2d, scale_factor=scale,
                                        compute_dtype=jnp.float32))
    out_f32 = jax.block_until_ready(fwd_f32(x, w_oihw, bias))
    assert out_f32.shape == (N, Cout, Hin * scale, Win * scale), out_f32.shape
    assert jnp.allclose(out_f32, ref, atol=1e-4, rtol=1e-4), \
        float(jnp.max(jnp.abs(out_f32 - ref)))

    # 2) default fast path: bf16 MXU operands, f32 accumulation
    fwd = jax.jit(functools.partial(resize_conv2d, scale_factor=scale))
    out = jax.block_until_ready(fwd(x, w_oihw, bias))
    assert out.shape == (N, Cout, Hin * scale, Win * scale), out.shape
    assert jnp.allclose(out, ref, atol=1e-2, rtol=1e-2), \
        float(jnp.max(jnp.abs(out - ref)))

    print("KERNEL_OK")
</pallas_src>

<mosaic_0001>
module attributes {stable_mosaic.version = 11 : i64} {
  func.func @_subpixel_conv_kernel(%arg0: i32, %arg1: memref<1x8x512xf32, #tpu.memory_space<vmem>>, %arg2: memref<32x72xf32, #tpu.memory_space<vmem>>, %arg3: memref<32x1xf32, #tpu.memory_space<vmem>>, %arg4: memref<1x32x384xf32, #tpu.memory_space<vmem>>) attributes {dimension_semantics = [#tpu.dimension_semantics<parallel>], iteration_bounds = array<i64: 2>, scalar_prefetch = 0 : i64, scratch_operands = 0 : i64, tpu.core_type = #tpu.core_type<tc>, window_params = [{transform_indices = @transform_0, window_bounds = array<i64: 1, 8, 512>}, {pipeline_mode = #tpu.pipeline_mode<synchronous>, transform_indices = @transform_1, window_bounds = array<i64: 32, 72>}, {pipeline_mode = #tpu.pipeline_mode<synchronous>, transform_indices = @transform_2, window_bounds = array<i64: 32, 1>}, {transform_indices = @transform_3, window_bounds = array<i64: 1, 32, 384>}]} {
    %c0 = arith.constant 0 : index
    %c0_0 = arith.constant 0 : index
    %c0_1 = arith.constant 0 : index
    %0 = vector.load %arg1[%c0, %c0_0, %c0_1] : memref<1x8x512xf32, #tpu.memory_space<vmem>>, vector<1x8x384xf32>
    %1 = vector.shape_cast %0 : vector<1x8x384xf32> to vector<8x384xf32>
    %c0_2 = arith.constant 0 : index
    %c0_3 = arith.constant 0 : index
    %c1 = arith.constant 1 : index
    %2 = vector.load %arg1[%c0_2, %c0_3, %c1] : memref<1x8x512xf32, #tpu.memory_space<vmem>>, vector<1x8x384xf32>
    %3 = vector.shape_cast %2 : vector<1x8x384xf32> to vector<8x384xf32>
    %c0_4 = arith.constant 0 : index
    %c0_5 = arith.constant 0 : index
    %c2 = arith.constant 2 : index
    %4 = vector.load %arg1[%c0_4, %c0_5, %c2] : memref<1x8x512xf32, #tpu.memory_space<vmem>>, vector<1x8x384xf32>
    %5 = vector.shape_cast %4 : vector<1x8x384xf32> to vector<8x384xf32>
    %c0_6 = arith.constant 0 : index
    %c0_7 = arith.constant 0 : index
    %c24 = arith.constant 24 : index
    %6 = vector.load %arg1[%c0_6, %c0_7, %c24] : memref<1x8x512xf32, #tpu.memory_space<vmem>>, vector<1x8x384xf32>
    %7 = vector.shape_cast %6 : vector<1x8x384xf32> to vector<8x384xf32>
    %c0_8 = arith.constant 0 : index
    %c0_9 = arith.constant 0 : index
    %c25 = arith.constant 25 : index
    %8 = vector.load %arg1[%c0_8, %c0_9, %c25] : memref<1x8x512xf32, #tpu.memory_space<vmem>>, vector<1x8x384xf32>
    %9 = vector.shape_cast %8 : vector<1x8x384xf32> to vector<8x384xf32>
    %c0_10 = arith.constant 0 : index
    %c0_11 = arith.constant 0 : index
    %c26 = arith.constant 26 : index
    %10 = vector.load %arg1[%c0_10, %c0_11, %c26] : memref<1x8x512xf32, #tpu.memory_space<vmem>>, vector<1x8x384xf32>
    %11 = vector.shape_cast %10 : vector<1x8x384xf32> to vector<8x384xf32>
    %c0_12 = arith.constant 0 : index
    %c0_13 = arith.constant 0 : index
    %c48 = arith.constant 48 : index
    %12 = vector.load %arg1[%c0_12, %c0_13, %c48] : memref<1x8x512xf32, #tpu.memory_space<vmem>>, vector<1x8x384xf32>
    %13 = vector.shape_cast %12 : vector<1x8x384xf32> to vector<8x384xf32>
    %c0_14 = arith.constant 0 : index
    %c0_15 = arith.constant 0 : index
    %c49 = arith.constant 49 : index
    %14 = vector.load %arg1[%c0_14, %c0_15, %c49] : memref<1x8x512xf32, #tpu.memory_space<vmem>>, vector<1x8x384xf32>
    %15 = vector.shape_cast %14 : vector<1x8x384xf32> to vector<8x384xf32>
    %c0_16 = arith.constant 0 : index
    %c0_17 = arith.constant 0 : index
    %c50 = arith.constant 50 : index
    %16 = vector.load %arg1[%c0_16, %c0_17, %c50] : memref<1x8x512xf32, #tpu.memory_space<vmem>>, vector<1x8x384xf32>
    %17 = vector.shape_cast %16 : vector<1x8x384xf32> to vector<8x384xf32>
    %18 = tpu.concatenate %1, %3, %5, %7, %9, %11, %13, %15, %17 in 0 : vector<8x384xf32>, vector<8x384xf32>, vector<8x384xf32>, vector<8x384xf32>, vector<8x384xf32>, vector<8x384xf32>, vector<8x384xf32>, vector<8x384xf32>, vector<8x384xf32> -> vector<72x384xf32>
    %c0_18 = arith.constant 0 : index
    %c0_19 = arith.constant 0 : index
    %19 = vector.load %arg2[%c0_18, %c0_19] : memref<32x72xf32, #tpu.memory_space<vmem>>, vector<32x72xf32>
    %cst = arith.constant dense<0.000000e+00> : vector<32x384xf32>
    %20 = tpu.matmul %19, %18, %cst {dimension_numbers = #tpu.dot_dimension_numbers<[1], [0], [0], [1], [0, 0, 1, 1], [], []>} : vector<32x72xf32>, vector<72x384xf32>, vector<32x384xf32> -> vector<32x384xf32>
    %c0_20 = arith.constant 0 : index
    %c0_21 = arith.constant 0 : index
    %21 = vector.load %arg3[%c0_20, %c0_21] : memref<32x1xf32, #tpu.memory_space<vmem>>, vector<32x1xf32>
    %22 = vector.broadcast %21 : vector<32x1xf32> to vector<32x384xf32>
    %23 = arith.addf %20, %22 : vector<32x384xf32>
    %c0_22 = arith.constant 0 : index
    %c0_23 = arith.constant 0 : index
    %c0_24 = arith.constant 0 : index
    %24 = vector.load %arg4[%c0_22, %c0_23, %c0_24] : memref<1x32x384xf32, #tpu.memory_space<vmem>>, vector<1x32x384xf32>
    %25 = vector.shape_cast %24 : vector<1x32x384xf32> to vector<32x384xf32>
    %26 = vector.shape_cast %23 : vector<32x384xf32> to vector<1x32x384xf32>
    tpu.vector_store %arg4[%c0_22, %c0_23, %c0_24], %26 {strides = array<i32>} : memref<1x32x384xf32, #tpu.memory_space<vmem>>, vector<1x32x384xf32>,
    return
  }
  func.func @transform_0(%arg0: i32) -> (i32, i32, i32) {
    %c0_i32 = arith.constant 0 : i32
    %c0_i32_0 = arith.constant 0 : i32
    %c0_i32_1 = arith.constant 0 : i32
    return %arg0, %c0_i32, %c0_i32_0 : i32, i32, i32
  }
  func.func @transform_1(%arg0: i32) -> (i32, i32) {
    %c0_i32 = arith.constant 0 : i32
    %c0_i32_0 = arith.constant 0 : i32
    %c0_i32_1 = arith.constant 0 : i32
    return %c0_i32, %c0_i32_0 : i32, i32
  }
  func.func @transform_2(%arg0: i32) -> (i32, i32) {
    %c0_i32 = arith.constant 0 : i32
    %c0_i32_0 = arith.constant 0 : i32
    %c0_i32_1 = arith.constant 0 : i32
    return %c0_i32, %c0_i32_0 : i32, i32
  }
  func.func @transform_3(%arg0: i32) -> (i32, i32, i32) {
    %c0_i32 = arith.constant 0 : i32
    %c0_i32_0 = arith.constant 0 : i32
    %c0_i32_1 = arith.constant 0 : i32
    return %arg0, %c0_i32, %c0_i32_0 : i32, i32, i32
  }
}

</mosaic_0001>

<llo_original>
// kernel: resize_conv2d.1
$region0: #{resize_conv2d.1}
  #allocation0 [shape = 'u32[]', space=smem, size = 0x4, offset = 0x4, fixed_abs, tag = 'smem constant byte address 0x4 - core index']
  #allocation1 [shape = 'u32[144,128]{1,0:T(1,128)}', space=vmem, size = 0x12000, scoped, tag = 'internal scratch']
  %s0 = inlined_call_operand.vmem [shape: f32[2,8,512], index: 0, kind: input, shape index: {}]
  %s1 = inlined_call_operand.vmem [shape: f32[32,72], index: 1, kind: input, shape index: {}]
  %s2 = inlined_call_operand.vmem [shape: f32[32,1], index: 2, kind: input, shape index: {}]
  %s3 = inlined_call_operand.vmem [shape: f32[2,32,384], index: 3, kind: output, shape index: {}]
  %s4 = sld [smem:[#allocation0]]
  $region45: #{resize_conv2d.1} parent=0
    _
  %s6 = ssub.s32 1, %s4
  %s7 = scalar_select 0, %s6, %s4
  loop: start=0, step=1, limit=4
  $region2: #{resize_conv2d.1} parent=0 // loop_pre_header
    _
  $region3: #{resize_conv2d.1} parent=0 // loop_header
    %s9 = sphi 0, %s13
    %p10 = scmp.ge.s32.totalorder %s9, 4
    %s19 = sphi 0, %s21
    %s22 = sphi 0, %s19
    %s23 = sphi 0, %s22
    %s39 = sphi 0, %s23
    %s43 = sphi 0, %s43
    %s45 = sphi 0, %s43
    %s46 = sphi 0, %s45
    %s60 = sphi 0, %s46
    %s64 = sphi 0, %s64
    %s66 = sphi 0, %s64
    %s67 = sphi 0, %s66
    %s81 = sphi 0, %s67
    %s87 = sphi 0, %s89
    %s90 = sphi 0, %s87
    %s91 = sphi 0, %s90
    %s107 = sphi 0, %s91
  $region4: #{resize_conv2d.1} parent=0 // loop_header_branch
    %12 = sbr.rel (%p10) target = $region8
  $region5: #{resize_conv2d.1} parent=0 // loop_body
    %s14 = ssub.s32 %s9, 1
    %s15 = ssub.s32 %s9, 2
    %s16 = sadd.s32 %s9, 1
    %s17 = ssub.s32 %s9, %s16
    %p18 = scmp.eq.s32.totalorder %s17, 0
    %s20 = sadd.s32 %s19, 1
    %s21 = scalar_select %p18, %s19, %s20
    %p24 = pneg %p18
    %p25 = scmp.eq.s32.totalorder %s9, 1
    %p26 = por %p24, %p25
    %p27 = scmp.ne.s32.totalorder %s19, %s22
    %p28 = scmp.eq.s32.totalorder %s9, 0
    %p29 = por %p27, %p28
    %p30 = scmp.ne.s32.totalorder %s19, %s22
    %p31 = scmp.eq.s32.totalorder %s14, 1
    %p32 = por %p30, %p31
    %p33 = scmp.ne.s32.totalorder %s22, %s23
    %p34 = scmp.eq.s32.totalorder %s14, 0
    %p35 = por %p33, %p34
    %p36 = scmp.ne.s32.totalorder %s22, %s23
    %p37 = scmp.eq.s32.totalorder %s15, 1
    %p38 = por %p36, %p37
    %p40 = scmp.ne.s32.totalorder %s23, %s39
    %p41 = scmp.eq.s32.totalorder %s15, 0
    %p42 = por %p40, %p41
    %s44 = sadd.s32 %s43, 1
    %p47 = scmp.eq.s32.totalorder %s9, 1
    %p48 = scmp.ne.s32.totalorder %s43, %s45
    %p49 = scmp.eq.s32.totalorder %s9, 0
    %p50 = por %p48, %p49
    %p51 = scmp.ne.s32.totalorder %s43, %s45
    %p52 = scmp.eq.s32.totalorder %s14, 1
    %p53 = por %p51, %p52
    %p54 = scmp.ne.s32.totalorder %s45, %s46
    %p55 = scmp.eq.s32.totalorder %s14, 0
    %p56 = por %p54, %p55
    %p57 = scmp.ne.s32.totalorder %s45, %s46
    %p58 = scmp.eq.s32.totalorder %s15, 1
    %p59 = por %p57, %p58
    %p61 = scmp.ne.s32.totalorder %s46, %s60
    %p62 = scmp.eq.s32.totalorder %s15, 0
    %p63 = por %p61, %p62
    %s65 = sadd.s32 %s64, 1
    %p68 = scmp.eq.s32.totalorder %s9, 1
    %p69 = scmp.ne.s32.totalorder %s64, %s66
    %p70 = scmp.eq.s32.totalorder %s9, 0
    %p71 = por %p69, %p70
    %p72 = scmp.ne.s32.totalorder %s64, %s66
    %p73 = scmp.eq.s32.totalorder %s14, 1
    %p74 = por %p72, %p73
    %p75 = scmp.ne.s32.totalorder %s66, %s67
    %p76 = scmp.eq.s32.totalorder %s14, 0
    %p77 = por %p75, %p76
    %p78 = scmp.ne.s32.totalorder %s66, %s67
    %p79 = scmp.eq.s32.totalorder %s15, 1
    %p80 = por %p78, %p79
    %p82 = scmp.ne.s32.totalorder %s67, %s81
    %p83 = scmp.eq.s32.totalorder %s15, 0
    %p84 = por %p82, %p83
    %s85 = ssub.s32 %s9, %s16
    %p86 = scmp.eq.s32.totalorder %s85, 0
    %s88 = sadd.s32 %s87, 1
    %s89 = scalar_select %p86, %s87, %s88
    %p92 = pneg %p86
    %p93 = scmp.eq.s32.totalorder %s9, 1
    %p94 = por %p92, %p93
    %p95 = scmp.ne.s32.totalorder %s87, %s90
    %p96 = scmp.eq.s32.totalorder %s9, 0
    %p97 = por %p95, %p96
    %p98 = scmp.ne.s32.totalorder %s87, %s90
    %p99 = scmp.eq.s32.totalorder %s14, 1
    %p100 = por %p98, %p99
    %p101 = scmp.ne.s32.totalorder %s90, %s91
    %p102 = scmp.eq.s32.totalorder %s14, 0
    %p103 = por %p101, %p102
    %p104 = scmp.ne.s32.totalorder %s90, %s91
    %p105 = scmp.eq.s32.totalorder %s15, 1
    %p106 = por %p104, %p105
    %p108 = scmp.ne.s32.totalorder %s91, %s107
    %p109 = scmp.eq.s32.totalorder %s15, 0
    %p110 = por %p108, %p109
    %p111 = scmp.le.s32.totalorder 1, %s9
    %p112 = scmp.lt.s32.totalorder %s9, 3
    %p113 = pnand %p111, %p112
    %p114 = pneg %p113
    // Predicated region
    $region9: #{resize_conv2d.1} parent=5 // pred_check
      _
    $region10: #{resize_conv2d.1} parent=5 // pred_check_branch
      %116 = sbr.rel (%p113) target = $region12
    $region11: #{resize_conv2d.1} parent=5 // pred_region
      %s117 = ssub.s32 %s9, 1
      // Predicated region
      $region13: #{resize_conv2d.1} parent=11 // pred_check
        %p118 = pneg %p56
      $region14: #{resize_conv2d.1} parent=11 // pred_check_branch
        %120 = sbr.rel (%p118) target = $region16
      $region15: #{resize_conv2d.1} parent=11 // pred_region
        _
      $region16: #{resize_conv2d.1} parent=11 // pred_fallthru
        _
      // Predicated region
      $region17: #{resize_conv2d.1} parent=11 // pred_check
        %p121 = pneg %p77
      $region18: #{resize_conv2d.1} parent=11 // pred_check_branch
        %123 = sbr.rel (%p121) target = $region20
      $region19: #{resize_conv2d.1} parent=11 // pred_region
        _
      $region20: #{resize_conv2d.1} parent=11 // pred_fallthru
        _
    $region12: #{resize_conv2d.1} parent=5 // pred_fallthru
      _
    %p124 = scmp.lt.s32.totalorder %s9, 2
    // Predicated region
    $region21: #{resize_conv2d.1} parent=5 // pred_check
      %p125 = pneg %p124
    $region22: #{resize_conv2d.1} parent=5 // pred_check_branch
      %127 = sbr.rel (%p125) target = $region24
    $region23: #{resize_conv2d.1} parent=5 // pred_region
      // Predicated region
      $region25: #{resize_conv2d.1} parent=23 // pred_check
        %p128 = pneg %p29
      $region26: #{resize_conv2d.1} parent=23 // pred_check_branch
        %130 = sbr.rel (%p128) target = $region28
      $region27: #{resize_conv2d.1} parent=23 // pred_region
        %p131 = scmp.lt.s32.totalorder %s9, 1
        %s132 = scalar_select %p131, %s9, 1
        %s133 = smul.addr %s132, 4
        %s134 = smul.addr %s133, 8
        %s135 = scalar_lea.vmem %s0, %s134
      $region28: #{resize_conv2d.1} parent=23 // pred_fallthru
        _
    $region24: #{resize_conv2d.1} parent=5 // pred_fallthru
      _
    %p136 = scmp.le.s32.totalorder 1, %s9
    %p137 = scmp.lt.s32.totalorder %s9, 3
    %p138 = pnand %p136, %p137
    %p139 = pneg %p138
    // Predicated region
    $region29: #{resize_conv2d.1} parent=5 // pred_check
      _
    $region30: #{resize_conv2d.1} parent=5 // pred_check_branch
      %141 = sbr.rel (%p138) target = $region32
    $region31: #{resize_conv2d.1} parent=5 // pred_region
      %s142 = ssub.s32 %s9, 1
      %p143 = scmp.lt.s32.totalorder %s14, 1
      %s144 = scalar_select %p143, %s14, 1
      %s145 = smul.addr %s144, 4
      %s146 = smul.addr %s145, 8
      %s147 = scalar_lea.vmem %s0, %s146
      %p148 = pneg %p35
      %p149 = pneg %p32
      %p150 = pneg %p56
      %p151 = pneg %p53
      %p152 = pneg %p77
      %p153 = pneg %p74
      %p154 = pneg %p103
      %p155 = pneg %p100
      %p156 = scmp.lt.s32.totalorder %s14, 1
      %s157 = scalar_select %p156, %s14, 1
      %s158 = smul.addr %s157, 12
      %s159 = smul.addr %s158, 8
      %s160 = scalar_lea.vmem %s3, %s159
      %p161 = scmp.lt.s32.totalorder %s14, 1
      %s162 = scalar_select %p161, %s14, 1
      %s163 = smul.addr %s162, 4
      %s164 = smul.addr %s163, 8
      %s165 = scalar_lea.vmem %s0, %s164
      %p166 = scmp.lt.s32.totalorder %s14, 1
      %s167 = scalar_select %p166, %s14, 1
      %s168 = smul.addr %s167, 12
      %s169 = smul.addr %s168, 8
      %s170 = scalar_lea.vmem %s3, %s169
      %v171 = vld [vmem:[%s165] sm:$0xff]
      %v172 = vld [vmem:[%s165 + $0x8] sm:$0xff]
      %v173 = vld [vmem:[%s165 + $0x10] sm:$0xff]
      %v174 = vld [vmem:[%s165] sm:$0xff]
      %v175 = vld [vmem:[%s165 + $0x8] sm:$0xff]
      %v176 = vld [vmem:[%s165 + $0x10] sm:$0xff]
      %v177 = vld [vmem:[%s165 + $0x18] sm:$0xff]
      %182 = vrot.lane.b32.xlu0 %v174, 127
      %v183 = vpop.permute.xlu0 %182
      %184 = vrot.lane.b32.xlu0 %v175, 127
      %v185 = vpop.permute.xlu0 %184
      %186 = vrot.lane.b32.xlu0 %v176, 127
      %v187 = vpop.permute.xlu0 %186
      %188 = vrot.lane.b32.xlu0 %v177, 127
      %v189 = vpop.permute.xlu0 %188
      %vm190 = vcmask 1039360
      %v191 = vsel %vm190, %v183, %v185
      %v192 = vsel %vm190, %v185, %v187
      %v193 = vsel %vm190, %v187, %v189
      %197 = vrot.lane.b32.xlu0 %v174, 126
      %v198 = vpop.permute.xlu0 %197
      %199 = vrot.lane.b32.xlu0 %v175, 126
      %v200 = vpop.permute.xlu0 %199
      %201 = vrot.lane.b32.xlu0 %v176, 126
      %v202 = vpop.permute.xlu0 %201
      %203 = vrot.lane.b32.xlu0 %v177, 126
      %v204 = vpop.permute.xlu0 %203
      %vm205 = vcmask 1031168
      %v206 = vsel %vm205, %v198, %v200
      %v207 = vsel %vm205, %v200, %v202
      %v208 = vsel %vm205, %v202, %v204
      %212 = vrot.lane.b32.xlu0 %v174, 104
      %v213 = vpop.permute.xlu0 %212
      %214 = vrot.lane.b32.xlu0 %v175, 104
      %v215 = vpop.permute.xlu0 %214
      %216 = vrot.lane.b32.xlu0 %v176, 104
      %v217 = vpop.permute.xlu0 %216
      %218 = vrot.lane.b32.xlu0 %v177, 104
      %v219 = vpop.permute.xlu0 %218
      %vm220 = vcmask 850944
      %v221 = vsel %vm220, %v213, %v215
      %v222 = vsel %vm220, %v215, %v217
      %v223 = vsel %vm220, %v217, %v219
      %227 = vrot.lane.b32.xlu0 %v174, 103
      %v228 = vpop.permute.xlu0 %227
      %229 = vrot.lane.b32.xlu0 %v175, 103
      %v230 = vpop.permute.xlu0 %229
      %231 = vrot.lane.b32.xlu0 %v176, 103
      %v232 = vpop.permute.xlu0 %231
      %233 = vrot.lane.b32.xlu0 %v177, 103
      %v234 = vpop.permute.xlu0 %233
      %vm235 = vcmask 842752
      %v236 = vsel %vm235, %v228, %v230
      %v237 = vsel %vm235, %v230, %v232
      %v238 = vsel %vm235, %v232, %v234
      %242 = vrot.lane.b32.xlu0 %v174, 102
      %v243 = vpop.permute.xlu0 %242
      %244 = vrot.lane.b32.xlu0 %v175, 102
      %v245 = vpop.permute.xlu0 %244
      %246 = vrot.lane.b32.xlu0 %v176, 102
      %v247 = vpop.permute.xlu0 %246
      %248 = vrot.lane.b32.xlu0 %v177, 102
      %v249 = vpop.permute.xlu0 %248
      %vm250 = vcmask 834560
      %v251 = vsel %vm250, %v243, %v245
      %v252 = vsel %vm250, %v245, %v247
      %v253 = vsel %vm250, %v247, %v249
      %257 = vrot.lane.b32.xlu0 %v174, 80
      %v258 = vpop.permute.xlu0 %257
      %259 = vrot.lane.b32.xlu0 %v175, 80
      %v260 = vpop.permute.xlu0 %259
      %261 = vrot.lane.b32.xlu0 %v176, 80
      %v262 = vpop.permute.xlu0 %261
      %263 = vrot.lane.b32.xlu0 %v177, 80
      %v264 = vpop.permute.xlu0 %263
      %vm265 = vcmask 654336
      %v266 = vsel %vm265, %v258, %v260
      %v267 = vsel %vm265, %v260, %v262
      %v268 = vsel %vm265, %v262, %v264
      %272 = vrot.lane.b32.xlu0 %v174, 79
      %v273 = vpop.permute.xlu0 %272
      %274 = vrot.lane.b32.xlu0 %v175, 79
      %v275 = vpop.permute.xlu0 %274
      %276 = vrot.lane.b32.xlu0 %v176, 79
      %v277 = vpop.permute.xlu0 %276
      %278 = vrot.lane.b32.xlu0 %v177, 79
      %v279 = vpop.permute.xlu0 %278
      %vm280 = vcmask 646144
      %v281 = vsel %vm280, %v273, %v275
      %v282 = vsel %vm280, %v275, %v277
      %v283 = vsel %vm280, %v277, %v279
      %287 = vrot.lane.b32.xlu0 %v174, 78
      %v288 = vpop.permute.xlu0 %287
      %289 = vrot.lane.b32.xlu0 %v175, 78
      %v290 = vpop.permute.xlu0 %289
      %291 = vrot.lane.b32.xlu0 %v176, 78
      %v292 = vpop.permute.xlu0 %291
      %293 = vrot.lane.b32.xlu0 %v177, 78
      %v294 = vpop.permute.xlu0 %293
      %vm295 = vcmask 637952
      %v296 = vsel %vm295, %v288, %v290
      %v297 = vsel %vm295, %v290, %v292
      %v298 = vsel %vm295, %v292, %v294
      %v302 = vld [vmem:[%s1] sm:$0xff]
      %v303 = vld [vmem:[%s1 + $0x8] sm:$0xff]
      %v304 = vld [vmem:[%s1 + $0x10] sm:$0xff]
      %v305 = vld [vmem:[%s1 + $0x18] sm:$0xff]
      %v306 = vld [vmem:[%s2] sm:$0xff]
      %v307 = vld [vmem:[%s2 + $0x8] sm:$0xff]
      %v308 = vld [vmem:[%s2 + $0x10] sm:$0xff]
      %v309 = vld [vmem:[%s2 + $0x18] sm:$0xff]
      %311 = vset.pattern.permute.xlu0 0
      %312 = vperm.xlu0 %311, %v306
      %v313 = vpop.permute.xlu0 %312
      %316 = vset.pattern.permute.xlu0 0
      %317 = vperm.xlu0 %316, %v307
      %v318 = vpop.permute.xlu0 %317
      %321 = vset.pattern.permute.xlu0 0
      %322 = vperm.xlu0 %321, %v308
      %v323 = vpop.permute.xlu0 %322
      %326 = vset.pattern.permute.xlu0 0
      %327 = vperm.xlu0 %326, %v309
      %v328 = vpop.permute.xlu0 %327
      %vm330 = vcmask 588800
      %v332 = vsel %vm330, %v302, 0
      %v335 = vsel %vm330, %v303, 0
      %v338 = vsel %vm330, %v304, 0
      %v341 = vsel %vm330, %v305, 0
      %343 = vmatprep.subr.mxu0 0.0
      %344 = vmatpush1.msra.mxu0 0.0
      %345 = vmatprep.subr.mxu0 0.0
      %346 = vmatpush1.msra.mxu0 0.0
      %347 = vmatprep.subr.mxu0 0.0
      %348 = vmatpush1.msra.mxu0 0.0
      %349 = vmatprep.subr.mxu0 0.0
      %350 = vmatpush1.msra.mxu0 0.0
      %351 = vmatprep.subr.mxu0 0.0
      %352 = vmatpush1.msra.mxu0 0.0
      %353 = vmatprep.subr.mxu0 0.0
      %354 = vmatpush1.msra.mxu0 0.0
      %355 = vmatprep.subr.mxu0 0.0
      %356 = vmatpush1.msra.mxu0 0.0
      %357 = vmatprep.subr.mxu0 %v297
      %358 = vmatpush1.msra.mxu0 %v296
      %359 = vmatprep.subr.mxu0 %v282
      %360 = vmatpush1.msra.mxu0 %v281
      %361 = vmatprep.subr.mxu0 %v267
      %362 = vmatpush1.msra.mxu0 %v266
      %363 = vmatprep.subr.mxu0 %v252
      %364 = vmatpush1.msra.mxu0 %v251
      %365 = vmatprep.subr.mxu0 %v237
      %366 = vmatpush1.msra.mxu0 %v236
      %367 = vmatprep.subr.mxu0 %v222
      %368 = vmatpush1.msra.mxu0 %v221
      %369 = vmatprep.subr.mxu0 %v207
      %370 = vmatpush1.msra.mxu0 %v206
      %371 = vmatprep.subr.mxu0 %v192
      %372 = vmatpush1.msra.mxu0 %v191
      %373 = vmatprep.subr.mxu0 %v172
      %374 = vmatpush1.msra.mxu0 %v171
      %375 = vmatprep.subr.mxu0 0.0
      %376 = vmatpush2.msra.mxu0 0.0
      %377 = vmatprep.subr.mxu0 0.0
      %378 = vmatpush2.msra.mxu0 0.0
      %379 = vmatprep.subr.mxu0 0.0
      %380 = vmatpush2.msra.mxu0 0.0
      %381 = vmatprep.subr.mxu0 0.0
      %382 = vmatpush2.msra.mxu0 0.0
      %383 = vmatprep.subr.mxu0 0.0
      %384 = vmatpush2.msra.mxu0 0.0
      %385 = vmatprep.subr.mxu0 0.0
      %386 = vmatpush2.msra.mxu0 0.0
      %387 = vmatprep.subr.mxu0 0.0
      %388 = vmatpush2.msra.mxu0 0.0
      %389 = vmatprep.subr.mxu0 0.0
      %390 = vmatpush2.msra.mxu0 0.0
      %391 = vmatprep.subr.mxu0 0.0
      %392 = vmatpush2.msra.mxu0 0.0
      %393 = vmatprep.subr.mxu0 0.0
      %394 = vmatpush2.msra.mxu0 0.0
      %395 = vmatprep.subr.mxu0 0.0
      %396 = vmatpush2.msra.mxu0 0.0
      %397 = vmatprep.subr.mxu0 0.0
      %398 = vmatpush2.msra.mxu0 0.0
      %399 = vmatprep.subr.mxu0 0.0
      %400 = vmatpush2.msra.mxu0 0.0
      %401 = vmatprep.subr.mxu0 0.0
      %402 = vmatpush2.msra.mxu0 0.0
      %403 = vmatprep.subr.mxu0 0.0
      %404 = vmatpush2.msra.mxu0 0.0
      %405 = vmatprep.subr.mxu0 0.0
      %406 = vmatpush2.msra.mxu0 0.0
      %407 = vmatprep.mubr.f32.mxu0 0.0
      %408 = vmatmul.mubr.f32.gmra.mxu0 %v332
      %v409 = vpop.f32.mrf.mxu0
      %v410 = vadd.f32 %v313, %v409
      %v411 = vpop.f32.mrf.mxu0
      %v412 = vadd.f32 %v313, %v411
      %413 = vmatprep.mubr.f32.mxu0 0.0
      %414 = vmatmul.mubr.f32.gmra.mxu0 %v335
      %v415 = vpop.f32.mrf.mxu0
      %v416 = vadd.f32 %v318, %v415
      %v417 = vpop.f32.mrf.mxu0
      %v418 = vadd.f32 %v318, %v417
      %419 = vmatprep.mubr.f32.mxu0 0.0
      %420 = vmatmul.mubr.f32.gmra.mxu0 %v338
      %v421 = vpop.f32.mrf.mxu0
      %v422 = vadd.f32 %v323, %v421
      %v423 = vpop.f32.mrf.mxu0
      %v424 = vadd.f32 %v323, %v423
      %425 = vmatprep.mubr.f32.mxu0 0.0
      %426 = vmatmul.mubr.f32.gmra.mxu0 %v341
      %v427 = vpop.f32.mrf.mxu0
      %v428 = vadd.f32 %v328, %v427
      %v429 = vpop.f32.mrf.mxu0
      %v430 = vadd.f32 %v328, %v429
      %431 = vdwg.mxu0
      %432 = vmatprep.subr.mxu0 0.0
      %433 = vmatpush1.msra.mxu0 0.0
      %434 = vmatprep.subr.mxu0 0.0
      %435 = vmatpush1.msra.mxu0 0.0
      %436 = vmatprep.subr.mxu0 0.0
      %437 = vmatpush1.msra.mxu0 0.0
      %438 = vmatprep.subr.mxu0 0.0
      %439 = vmatpush1.msra.mxu0 0.0
      %440 = vmatprep.subr.mxu0 0.0
      %441 = vmatpush1.msra.mxu0 0.0
      %442 = vmatprep.subr.mxu0 0.0
      %443 = vmatpush1.msra.mxu0 0.0
      %444 = vmatprep.subr.mxu0 0.0
      %445 = vmatpush1.msra.mxu0 0.0
      %446 = vmatprep.subr.mxu0 0.0
      %447 = vmatpush1.msra.mxu0 %v298
      %448 = vmatprep.subr.mxu0 0.0
      %449 = vmatpush1.msra.mxu0 %v283
      %450 = vmatprep.subr.mxu0 0.0
      %451 = vmatpush1.msra.mxu0 %v268
      %452 = vmatprep.subr.mxu0 0.0
      %453 = vmatpush1.msra.mxu0 %v253
      %454 = vmatprep.subr.mxu0 0.0
      %455 = vmatpush1.msra.mxu0 %v238
      %456 = vmatprep.subr.mxu0 0.0
      %457 = vmatpush1.msra.mxu0 %v223
      %458 = vmatprep.subr.mxu0 0.0
      %459 = vmatpush1.msra.mxu0 %v208
      %460 = vmatprep.subr.mxu0 0.0
      %461 = vmatpush1.msra.mxu0 %v193
      %462 = vmatprep.subr.mxu0 0.0
      %463 = vmatpush1.msra.mxu0 %v173
      %464 = vmatprep.subr.mxu0 0.0
      %465 = vmatpush2.msra.mxu0 0.0
      %466 = vmatprep.subr.mxu0 0.0
      %467 = vmatpush2.msra.mxu0 0.0
      %468 = vmatprep.subr.mxu0 0.0
      %469 = vmatpush2.msra.mxu0 0.0
      %470 = vmatprep.subr.mxu0 0.0
      %471 = vmatpush2.msra.mxu0 0.0
      %472 = vmatprep.subr.mxu0 0.0
      %473 = vmatpush2.msra.mxu0 0.0
      %474 = vmatprep.subr.mxu0 0.0
      %475 = vmatpush2.msra.mxu0 0.0
      %476 = vmatprep.subr.mxu0 0.0
      %477 = vmatpush2.msra.mxu0 0.0
      %478 = vmatprep.subr.mxu0 0.0
      %479 = vmatpush2.msra.mxu0 0.0
      %480 = vmatprep.subr.mxu0 0.0
      %481 = vmatpush2.msra.mxu0 0.0
      %482 = vmatprep.subr.mxu0 0.0
      %483 = vmatpush2.msra.mxu0 0.0
      %484 = vmatprep.subr.mxu0 0.0
      %485 = vmatpush2.msra.mxu0 0.0
      %486 = vmatprep.subr.mxu0 0.0
      %487 = vmatpush2.msra.mxu0 0.0
      %488 = vmatprep.subr.mxu0 0.0
      %489 = vmatpush2.msra.mxu0 0.0
      %490 = vmatprep.subr.mxu0 0.0
      %491 = vmatpush2.msra.mxu0 0.0
      %492 = vmatprep.subr.mxu0 0.0
      %493 = vmatpush2.msra.mxu0 0.0
      %494 = vmatprep.subr.mxu0 0.0
      %495 = vmatpush2.msra.mxu0 0.0
      %496 = vmatprep.mubr.f32.mxu0 0.0
      %497 = vmatmul.mubr.f32.gmra.mxu0 %v332
      %v498 = vpop.f32.mrf.mxu0
      %v499 = vadd.f32 %v313, %v498
      %v500 = vpop.f32.mrf.mxu0
      %501 = vmatprep.mubr.f32.mxu0 0.0
      %502 = vmatmul.mubr.f32.gmra.mxu0 %v335
      %v503 = vpop.f32.mrf.mxu0
      %v504 = vadd.f32 %v318, %v503
      %v505 = vpop.f32.mrf.mxu0
      %506 = vmatprep.mubr.f32.mxu0 0.0
      %507 = vmatmul.mubr.f32.gmra.mxu0 %v338
      %v508 = vpop.f32.mrf.mxu0
      %v509 = vadd.f32 %v323, %v508
      %v510 = vpop.f32.mrf.mxu0
      %511 = vmatprep.mubr.f32.mxu0 0.0
      %512 = vmatmul.mubr.f32.gmra.mxu0 %v341
      %v513 = vpop.f32.mrf.mxu0
      %v514 = vadd.f32 %v328, %v513
      %v515 = vpop.f32.mrf.mxu0
      %516 = vdwg.mxu0
      %517 = vst [vmem:[%s170] sm:$0xff] %v410
      %518 = vst [vmem:[%s170 + $0x8] sm:$0xff] %v412
      %519 = vst [vmem:[%s170 + $0x10] sm:$0xff] %v499
      %520 = vst [vmem:[%s170 + $0x18] sm:$0xff] %v416
      %521 = vst [vmem:[%s170 + $0x20] sm:$0xff] %v418
      %522 = vst [vmem:[%s170 + $0x28] sm:$0xff] %v504
      %523 = vst [vmem:[%s170 + $0x30] sm:$0xff] %v422
      %524 = vst [vmem:[%s170 + $0x38] sm:$0xff] %v424
      %525 = vst [vmem:[%s170 + $0x40] sm:$0xff] %v509
      %526 = vst [vmem:[%s170 + $0x48] sm:$0xff] %v428
      %527 = vst [vmem:[%s170 + $0x50] sm:$0xff] %v430
      %528 = vst [vmem:[%s170 + $0x58] sm:$0xff] %v514
      %p529 = scmp.lt.s32.totalorder %s14, 1
      %s530 = scalar_select %p529, %s14, 1
      %s531 = smul.addr %s530, 12
      %s532 = smul.addr %s531, 8
      %s533 = scalar_lea.vmem %s3, %s532
      // Predicated region
      $region33: #{resize_conv2d.1} parent=31 // pred_check
        %p534 = pneg %p100
      $region34: #{resize_conv2d.1} parent=31 // pred_check_branch
        %536 = sbr.rel (%p534) target = $region36
      $region35: #{resize_conv2d.1} parent=31 // pred_region
        _
      $region36: #{resize_conv2d.1} parent=31 // pred_fallthru
        _
    $region32: #{resize_conv2d.1} parent=5 // pred_fallthru
      _
    %p537 = scmp.le.s32.totalorder 2, %s9
    // Predicated region
    $region37: #{resize_conv2d.1} parent=5 // pred_check
      %p538 = pneg %p537
    $region38: #{resize_conv2d.1} parent=5 // pred_check_branch
      %540 = sbr.rel (%p538) target = $region40
    $region39: #{resize_conv2d.1} parent=5 // pred_region
      %s541 = ssub.s32 %s9, 2
      // Predicated region
      $region41: #{resize_conv2d.1} parent=39 // pred_check
        %p542 = pneg %p106
      $region42: #{resize_conv2d.1} parent=39 // pred_check_branch
        %544 = sbr.rel (%p542) target = $region44
      $region43: #{resize_conv2d.1} parent=39 // pred_region
        %p545 = scmp.lt.s32.totalorder %s15, 1
        %s546 = scalar_select %p545, %s15, 1
        %s547 = smul.addr %s546, 12
        %s548 = smul.addr %s547, 8
        %s549 = scalar_lea.vmem %s3, %s548
      $region44: #{resize_conv2d.1} parent=39 // pred_fallthru
        _
    $region40: #{resize_conv2d.1} parent=5 // pred_fallthru
      _
  $region6: #{resize_conv2d.1} parent=0 // loop_footer
    %s13 = sadd.s32 1, %s9
  $region7: #{resize_conv2d.1} parent=0 // loop_footer_branch
    %8 = sbr.rel target = $region3
  $region8: #{resize_conv2d.1} parent=0 // loop_exit
    _

</llo_original>
